<compile_context>
chip_gen: v5e
topology: v5e:2x2
jax: 0.10.0
libtpu: 0.0.40
codegen_flags: <defaults>
</compile_context>

<pallas_src>
import jax
import jax.numpy as jnp
from jax.experimental import pallas as pl
from jax.experimental.pallas import tpu as pltpu


def rnn_fc_kernel(xflat_ref, h0_ref,
                  wih0_ref, whh0_ref, b0_ref,
                  wih1_ref, whh1_ref, b1_ref,
                  wfc_ref, bfc_ref,
                  out_ref):
    # xflat_ref: (T*Bp, I)  time-major flattened, row index = t*Bp + b, Bp % 8 == 0
    # h0_ref:    (L=2, Bp, H)
    # wih0_ref:  (I, H)   whh0_ref: (H, H)   (pre-transposed vs PyTorch)
    # b0_ref:    (1, H) = b_ih0 + b_hh0
    # wih1_ref:  (H, H)   whh1_ref: (H, H)
    # b1_ref:    (1, H) = b_ih1 + b_hh1
    # wfc_ref:   (T*H, Cp)  bfc_ref: (1, Cp)   (Cp % 128 == 0, zero-padded cols)
    # out_ref:   (Bp, Cp)
    TB, _ = xflat_ref.shape
    _, B, H = h0_ref.shape            # B here is the padded batch (multiple of 8)
    T = TB // B
    C = out_ref.shape[-1]

    # ---- batched layer-0 input projection (off the recurrent critical path) ----
    xproj = (jnp.dot(xflat_ref[...], wih0_ref[...],
                     preferred_element_type=jnp.float32)
             + b0_ref[...])                                   # (T*Bp, H)

    whh0 = whh0_ref[...]
    wih1 = wih1_ref[...]
    whh1 = whh1_ref[...]

    # Hoisted broadcasts — JAX does not CSE broadcast_in_dim inside the unroll.
    b1_b = jnp.broadcast_to(b1_ref[...], (B, H))
    fc_acc = jnp.broadcast_to(bfc_ref[...], (B, C)).astype(jnp.float32)

    h0 = h0_ref[0]                    # layer-0 hidden state, (Bp, H)
    h1 = h0_ref[1]                    # layer-1 hidden state, (Bp, H)

    # TODO(synk): at production T, replace this static unroll with lax.fori_loop
    # carrying (h0, h1, fc_acc) and stream xproj / w_fc over T via BlockSpecs.
    for t in range(T):                # T=8 toy unroll; every slice start is
        xs = xproj[t * B:(t + 1) * B, :]          # sublane-aligned (t*Bp % 8 == 0)
        h0 = jnp.tanh(xs + jnp.dot(h0, whh0, preferred_element_type=jnp.float32))
        h1 = jnp.tanh(jnp.dot(h0, wih1, preferred_element_type=jnp.float32)
                      + jnp.dot(h1, whh1, preferred_element_type=jnp.float32)
                      + b1_b)
        # Per-step FC accumulation (H % 8 == 0 -> aligned slice); independent of
        # the recurrence chain, so it overlaps with the next step's serial dots.
        fc_acc = fc_acc + jnp.dot(h1, wfc_ref[t * H:(t + 1) * H, :],
                                  preferred_element_type=jnp.float32)

    out_ref[...] = fc_acc.astype(out_ref.dtype)   # lane-dense (Bp, 128k) store


def rnn_forward(x, h0, params):
    """x: (B, T, I) f32, h0: (2, B, H) f32 -> (B, num_classes) f32."""
    B, T, I = x.shape
    H = h0.shape[-1]
    C = params["b_fc"].shape[-1]

    SUB, LANE = 8, 128
    Bp = ((B + SUB - 1) // SUB) * SUB
    Cp = ((C + LANE - 1) // LANE) * LANE

    # Wrapper-side layout plumbing (pure XLA, outside the kernel):
    #  * time-major flatten + zero-pad batch to a sublane multiple,
    #  * zero-pad FC columns to a lane multiple (lane-dense output store),
    #  * pre-summed biases.
    x_tm = jnp.transpose(x, (1, 0, 2))                          # (T, B, I)
    x_tm = jnp.pad(x_tm, ((0, 0), (0, Bp - B), (0, 0)))
    x_flat = x_tm.reshape(T * Bp, I)                            # row = t*Bp + b
    h0_p = jnp.pad(h0, ((0, 0), (0, Bp - B), (0, 0)))
    b0 = params["b_ih0"] + params["b_hh0"]
    b1 = params["b_ih1"] + params["b_hh1"]
    w_fc = jnp.pad(params["w_fc"], ((0, 0), (0, Cp - C)))
    b_fc = jnp.pad(params["b_fc"], ((0, 0), (0, Cp - C)))

    vmem = pl.BlockSpec(memory_space=pltpu.MemorySpace.VMEM)
    args = (x_flat, h0_p,
            params["w_ih0"], params["w_hh0"], b0,
            params["w_ih1"], params["w_hh1"], b1,
            w_fc, b_fc)
    # Gridless single invocation: everything fits trivially in VMEM at these
    # shapes. See the header comment for the production-scale tiling plan.
    out = pl.pallas_call(
        rnn_fc_kernel,
        out_shape=jax.ShapeDtypeStruct((Bp, Cp), jnp.float32),
        in_specs=[vmem] * len(args),
        out_specs=vmem,
    )(*args)
    return out[:B, :C]          # trim the zero-padded batch rows / class columns


def init_params(key, input_size, hidden_size, seq_len, num_classes):
    """Deterministic synthetic init, PyTorch-style U(-1/sqrt(H), 1/sqrt(H))."""
    ks = jax.random.split(key, 10)
    bound = 1.0 / jnp.sqrt(jnp.float32(hidden_size))
    u = lambda k, shape: jax.random.uniform(k, shape, jnp.float32, -bound, bound)
    fc_in = hidden_size * seq_len
    return {
        # stored pre-transposed: (in_dim, H), (H, H), (T*H, C)
        "w_ih0": u(ks[0], (input_size, hidden_size)),
        "w_hh0": u(ks[1], (hidden_size, hidden_size)),
        "b_ih0": u(ks[2], (1, hidden_size)),
        "b_hh0": u(ks[3], (1, hidden_size)),
        "w_ih1": u(ks[4], (hidden_size, hidden_size)),
        "w_hh1": u(ks[5], (hidden_size, hidden_size)),
        "b_ih1": u(ks[6], (1, hidden_size)),
        "b_hh1": u(ks[7], (1, hidden_size)),
        "w_fc": u(ks[8], (fc_in, num_classes)),
        "b_fc": u(ks[9], (1, num_classes)),
    }


def reference_forward(x, h0, p):
    """Pure-JAX reference of nn.RNN(2 layers, tanh, batch_first) + Linear."""
    B, T, I = x.shape
    H = h0.shape[-1]
    # layer 0
    h = h0[0]
    outs0 = []
    for t in range(T):
        h = jnp.tanh(x[:, t, :] @ p["w_ih0"] + p["b_ih0"]
                     + h @ p["w_hh0"] + p["b_hh0"])
        outs0.append(h)
    y0 = jnp.stack(outs0, axis=1)
    # layer 1
    h = h0[1]
    outs1 = []
    for t in range(T):
        h = jnp.tanh(y0[:, t, :] @ p["w_ih1"] + p["b_ih1"]
                     + h @ p["w_hh1"] + p["b_hh1"])
        outs1.append(h)
    y1 = jnp.stack(outs1, axis=1).reshape(B, T * H)
    return y1 @ p["w_fc"] + p["b_fc"]


if __name__ == "__main__":
    # Small shapes consistent with the module (x: (B, T, input_size)).
    B, T, I, H, C = 2, 8, 28, 32, 10
    # TODO(synk): only the 'rnn' branch of the module is implemented (the gru/lstm
    # branches would be separate kernels with their gate equations).

    key = jax.random.PRNGKey(0)
    k_x, k_h, k_p = jax.random.split(key, 3)
    x = jax.random.normal(k_x, (B, T, I), jnp.float32)
    # The PyTorch forward draws h_0 ~ randn each call; reproduce deterministically.
    h0 = jax.random.normal(k_h, (2, B, H), jnp.float32)
    params = init_params(k_p, I, H, T, C)

    out = jax.block_until_ready(rnn_forward(x, h0, params))
    ref = reference_forward(x, h0, params)
    assert out.shape == (B, C)
    assert jnp.allclose(out, ref, atol=1e-4, rtol=1e-4), "mismatch vs reference"
    print("KERNEL_OK")
</pallas_src>

<mosaic_0001>
module attributes {stable_mosaic.version = 11 : i64} {
  func.func @rnn_fc_kernel(%arg0: memref<64x28xf32, #tpu.memory_space<vmem>>, %arg1: memref<2x8x32xf32, #tpu.memory_space<vmem>>, %arg2: memref<28x32xf32, #tpu.memory_space<vmem>>, %arg3: memref<32x32xf32, #tpu.memory_space<vmem>>, %arg4: memref<1x32xf32, #tpu.memory_space<vmem>>, %arg5: memref<32x32xf32, #tpu.memory_space<vmem>>, %arg6: memref<32x32xf32, #tpu.memory_space<vmem>>, %arg7: memref<1x32xf32, #tpu.memory_space<vmem>>, %arg8: memref<256x128xf32, #tpu.memory_space<vmem>>, %arg9: memref<1x128xf32, #tpu.memory_space<vmem>>, %arg10: memref<8x128xf32, #tpu.memory_space<vmem>>) attributes {dimension_semantics = [], scalar_prefetch = 0 : i64, scratch_operands = 0 : i64, tpu.core_type = #tpu.core_type<tc>} {
    %c0 = arith.constant 0 : index
    %c0_0 = arith.constant 0 : index
    %0 = vector.load %arg0[%c0, %c0_0] : memref<64x28xf32, #tpu.memory_space<vmem>>, vector<64x28xf32>
    %c0_1 = arith.constant 0 : index
    %c0_2 = arith.constant 0 : index
    %1 = vector.load %arg2[%c0_1, %c0_2] : memref<28x32xf32, #tpu.memory_space<vmem>>, vector<28x32xf32>
    %cst = arith.constant dense<0.000000e+00> : vector<64x32xf32>
    %2 = tpu.matmul %0, %1, %cst {dimension_numbers = #tpu.dot_dimension_numbers<[1], [0], [0], [1], [0, 0, 1, 1], [], []>} : vector<64x28xf32>, vector<28x32xf32>, vector<64x32xf32> -> vector<64x32xf32>
    %c0_3 = arith.constant 0 : index
    %c0_4 = arith.constant 0 : index
    %3 = vector.load %arg4[%c0_3, %c0_4] : memref<1x32xf32, #tpu.memory_space<vmem>>, vector<1x32xf32>
    %4 = vector.broadcast %3 : vector<1x32xf32> to vector<64x32xf32>
    %5 = arith.addf %2, %4 : vector<64x32xf32>
    %c0_5 = arith.constant 0 : index
    %c0_6 = arith.constant 0 : index
    %6 = vector.load %arg3[%c0_5, %c0_6] : memref<32x32xf32, #tpu.memory_space<vmem>>, vector<32x32xf32>
    %c0_7 = arith.constant 0 : index
    %c0_8 = arith.constant 0 : index
    %7 = vector.load %arg5[%c0_7, %c0_8] : memref<32x32xf32, #tpu.memory_space<vmem>>, vector<32x32xf32>
    %c0_9 = arith.constant 0 : index
    %c0_10 = arith.constant 0 : index
    %8 = vector.load %arg6[%c0_9, %c0_10] : memref<32x32xf32, #tpu.memory_space<vmem>>, vector<32x32xf32>
    %c0_11 = arith.constant 0 : index
    %c0_12 = arith.constant 0 : index
    %9 = vector.load %arg7[%c0_11, %c0_12] : memref<1x32xf32, #tpu.memory_space<vmem>>, vector<1x32xf32>
    %10 = vector.shape_cast %9 : vector<1x32xf32> to vector<1x32xf32>
    %11 = vector.broadcast %10 : vector<1x32xf32> to vector<8x32xf32>
    %c0_13 = arith.constant 0 : index
    %c0_14 = arith.constant 0 : index
    %12 = vector.load %arg9[%c0_13, %c0_14] : memref<1x128xf32, #tpu.memory_space<vmem>>, vector<1x128xf32>
    %13 = vector.shape_cast %12 : vector<1x128xf32> to vector<1x128xf32>
    %14 = vector.broadcast %13 : vector<1x128xf32> to vector<8x128xf32>
    %c0_15 = arith.constant 0 : index
    %c0_16 = arith.constant 0 : index
    %c0_17 = arith.constant 0 : index
    %15 = vector.load %arg1[%c0_15, %c0_16, %c0_17] : memref<2x8x32xf32, #tpu.memory_space<vmem>>, vector<1x8x32xf32>
    %16 = vector.shape_cast %15 : vector<1x8x32xf32> to vector<8x32xf32>
    %c1 = arith.constant 1 : index
    %c0_18 = arith.constant 0 : index
    %c0_19 = arith.constant 0 : index
    %17 = vector.load %arg1[%c1, %c0_18, %c0_19] : memref<2x8x32xf32, #tpu.memory_space<vmem>>, vector<1x8x32xf32>
    %18 = vector.shape_cast %17 : vector<1x8x32xf32> to vector<8x32xf32>
    %19 = vector.extract_strided_slice %5 {offsets = [0, 0], sizes = [8, 32], strides = [1, 1]} : vector<64x32xf32> to vector<8x32xf32>
    %cst_20 = arith.constant dense<0.000000e+00> : vector<8x32xf32>
    %20 = tpu.matmul %16, %6, %cst_20 {dimension_numbers = #tpu.dot_dimension_numbers<[1], [0], [0], [1], [0, 0, 1, 1], [], []>} : vector<8x32xf32>, vector<32x32xf32>, vector<8x32xf32> -> vector<8x32xf32>
    %21 = arith.addf %19, %20 : vector<8x32xf32>
    %22 = math.tanh %21 : vector<8x32xf32>
    %cst_21 = arith.constant dense<0.000000e+00> : vector<8x32xf32>
    %23 = tpu.matmul %22, %7, %cst_21 {dimension_numbers = #tpu.dot_dimension_numbers<[1], [0], [0], [1], [0, 0, 1, 1], [], []>} : vector<8x32xf32>, vector<32x32xf32>, vector<8x32xf32> -> vector<8x32xf32>
    %cst_22 = arith.constant dense<0.000000e+00> : vector<8x32xf32>
    %24 = tpu.matmul %18, %8, %cst_22 {dimension_numbers = #tpu.dot_dimension_numbers<[1], [0], [0], [1], [0, 0, 1, 1], [], []>} : vector<8x32xf32>, vector<32x32xf32>, vector<8x32xf32> -> vector<8x32xf32>
    %25 = arith.addf %23, %24 : vector<8x32xf32>
    %26 = arith.addf %25, %11 : vector<8x32xf32>
    %27 = math.tanh %26 : vector<8x32xf32>
    %c0_23 = arith.constant 0 : index
    %c0_24 = arith.constant 0 : index
    %28 = vector.load %arg8[%c0_23, %c0_24] : memref<256x128xf32, #tpu.memory_space<vmem>>, vector<32x128xf32>
    %cst_25 = arith.constant dense<0.000000e+00> : vector<8x128xf32>
    %29 = tpu.matmul %27, %28, %cst_25 {dimension_numbers = #tpu.dot_dimension_numbers<[1], [0], [0], [1], [0, 0, 1, 1], [], []>} : vector<8x32xf32>, vector<32x128xf32>, vector<8x128xf32> -> vector<8x128xf32>
    %30 = arith.addf %14, %29 : vector<8x128xf32>
    %31 = vector.extract_strided_slice %5 {offsets = [8, 0], sizes = [8, 32], strides = [1, 1]} : vector<64x32xf32> to vector<8x32xf32>
    %cst_26 = arith.constant dense<0.000000e+00> : vector<8x32xf32>
    %32 = tpu.matmul %22, %6, %cst_26 {dimension_numbers = #tpu.dot_dimension_numbers<[1], [0], [0], [1], [0, 0, 1, 1], [], []>} : vector<8x32xf32>, vector<32x32xf32>, vector<8x32xf32> -> vector<8x32xf32>
    %33 = arith.addf %31, %32 : vector<8x32xf32>
    %34 = math.tanh %33 : vector<8x32xf32>
    %cst_27 = arith.constant dense<0.000000e+00> : vector<8x32xf32>
    %35 = tpu.matmul %34, %7, %cst_27 {dimension_numbers = #tpu.dot_dimension_numbers<[1], [0], [0], [1], [0, 0, 1, 1], [], []>} : vector<8x32xf32>, vector<32x32xf32>, vector<8x32xf32> -> vector<8x32xf32>
    %cst_28 = arith.constant dense<0.000000e+00> : vector<8x32xf32>
    %36 = tpu.matmul %27, %8, %cst_28 {dimension_numbers = #tpu.dot_dimension_numbers<[1], [0], [0], [1], [0, 0, 1, 1], [], []>} : vector<8x32xf32>, vector<32x32xf32>, vector<8x32xf32> -> vector<8x32xf32>
    %37 = arith.addf %35, %36 : vector<8x32xf32>
    %38 = arith.addf %37, %11 : vector<8x32xf32>
    %39 = math.tanh %38 : vector<8x32xf32>
    %c32 = arith.constant 32 : index
    %c0_29 = arith.constant 0 : index
    %40 = vector.load %arg8[%c32, %c0_29] : memref<256x128xf32, #tpu.memory_space<vmem>>, vector<32x128xf32>
    %cst_30 = arith.constant dense<0.000000e+00> : vector<8x128xf32>
    %41 = tpu.matmul %39, %40, %cst_30 {dimension_numbers = #tpu.dot_dimension_numbers<[1], [0], [0], [1], [0, 0, 1, 1], [], []>} : vector<8x32xf32>, vector<32x128xf32>, vector<8x128xf32> -> vector<8x128xf32>
    %42 = arith.addf %30, %41 : vector<8x128xf32>
    %43 = vector.extract_strided_slice %5 {offsets = [16, 0], sizes = [8, 32], strides = [1, 1]} : vector<64x32xf32> to vector<8x32xf32>
    %cst_31 = arith.constant dense<0.000000e+00> : vector<8x32xf32>
    %44 = tpu.matmul %34, %6, %cst_31 {dimension_numbers = #tpu.dot_dimension_numbers<[1], [0], [0], [1], [0, 0, 1, 1], [], []>} : vector<8x32xf32>, vector<32x32xf32>, vector<8x32xf32> -> vector<8x32xf32>
    %45 = arith.addf %43, %44 : vector<8x32xf32>
    %46 = math.tanh %45 : vector<8x32xf32>
    %cst_32 = arith.constant dense<0.000000e+00> : vector<8x32xf32>
    %47 = tpu.matmul %46, %7, %cst_32 {dimension_numbers = #tpu.dot_dimension_numbers<[1], [0], [0], [1], [0, 0, 1, 1], [], []>} : vector<8x32xf32>, vector<32x32xf32>, vector<8x32xf32> -> vector<8x32xf32>
    %cst_33 = arith.constant dense<0.000000e+00> : vector<8x32xf32>
    %48 = tpu.matmul %39, %8, %cst_33 {dimension_numbers = #tpu.dot_dimension_numbers<[1], [0], [0], [1], [0, 0, 1, 1], [], []>} : vector<8x32xf32>, vector<32x32xf32>, vector<8x32xf32> -> vector<8x32xf32>
    %49 = arith.addf %47, %48 : vector<8x32xf32>
    %50 = arith.addf %49, %11 : vector<8x32xf32>
    %51 = math.tanh %50 : vector<8x32xf32>
    %c64 = arith.constant 64 : index
    %c0_34 = arith.constant 0 : index
    %52 = vector.load %arg8[%c64, %c0_34] : memref<256x128xf32, #tpu.memory_space<vmem>>, vector<32x128xf32>
    %cst_35 = arith.constant dense<0.000000e+00> : vector<8x128xf32>
    %53 = tpu.matmul %51, %52, %cst_35 {dimension_numbers = #tpu.dot_dimension_numbers<[1], [0], [0], [1], [0, 0, 1, 1], [], []>} : vector<8x32xf32>, vector<32x128xf32>, vector<8x128xf32> -> vector<8x128xf32>
    %54 = arith.addf %42, %53 : vector<8x128xf32>
    %55 = vector.extract_strided_slice %5 {offsets = [24, 0], sizes = [8, 32], strides = [1, 1]} : vector<64x32xf32> to vector<8x32xf32>
    %cst_36 = arith.constant dense<0.000000e+00> : vector<8x32xf32>
    %56 = tpu.matmul %46, %6, %cst_36 {dimension_numbers = #tpu.dot_dimension_numbers<[1], [0], [0], [1], [0, 0, 1, 1], [], []>} : vector<8x32xf32>, vector<32x32xf32>, vector<8x32xf32> -> vector<8x32xf32>
    %57 = arith.addf %55, %56 : vector<8x32xf32>
    %58 = math.tanh %57 : vector<8x32xf32>
    %cst_37 = arith.constant dense<0.000000e+00> : vector<8x32xf32>
    %59 = tpu.matmul %58, %7, %cst_37 {dimension_numbers = #tpu.dot_dimension_numbers<[1], [0], [0], [1], [0, 0, 1, 1], [], []>} : vector<8x32xf32>, vector<32x32xf32>, vector<8x32xf32> -> vector<8x32xf32>
    %cst_38 = arith.constant dense<0.000000e+00> : vector<8x32xf32>
    %60 = tpu.matmul %51, %8, %cst_38 {dimension_numbers = #tpu.dot_dimension_numbers<[1], [0], [0], [1], [0, 0, 1, 1], [], []>} : vector<8x32xf32>, vector<32x32xf32>, vector<8x32xf32> -> vector<8x32xf32>
    %61 = arith.addf %59, %60 : vector<8x32xf32>
    %62 = arith.addf %61, %11 : vector<8x32xf32>
    %63 = math.tanh %62 : vector<8x32xf32>
    %c96 = arith.constant 96 : index
    %c0_39 = arith.constant 0 : index
    %64 = vector.load %arg8[%c96, %c0_39] : memref<256x128xf32, #tpu.memory_space<vmem>>, vector<32x128xf32>
    %cst_40 = arith.constant dense<0.000000e+00> : vector<8x128xf32>
    %65 = tpu.matmul %63, %64, %cst_40 {dimension_numbers = #tpu.dot_dimension_numbers<[1], [0], [0], [1], [0, 0, 1, 1], [], []>} : vector<8x32xf32>, vector<32x128xf32>, vector<8x128xf32> -> vector<8x128xf32>
    %66 = arith.addf %54, %65 : vector<8x128xf32>
    %67 = vector.extract_strided_slice %5 {offsets = [32, 0], sizes = [8, 32], strides = [1, 1]} : vector<64x32xf32> to vector<8x32xf32>
    %cst_41 = arith.constant dense<0.000000e+00> : vector<8x32xf32>
    %68 = tpu.matmul %58, %6, %cst_41 {dimension_numbers = #tpu.dot_dimension_numbers<[1], [0], [0], [1], [0, 0, 1, 1], [], []>} : vector<8x32xf32>, vector<32x32xf32>, vector<8x32xf32> -> vector<8x32xf32>
    %69 = arith.addf %67, %68 : vector<8x32xf32>
    %70 = math.tanh %69 : vector<8x32xf32>
    %cst_42 = arith.constant dense<0.000000e+00> : vector<8x32xf32>
    %71 = tpu.matmul %70, %7, %cst_42 {dimension_numbers = #tpu.dot_dimension_numbers<[1], [0], [0], [1], [0, 0, 1, 1], [], []>} : vector<8x32xf32>, vector<32x32xf32>, vector<8x32xf32> -> vector<8x32xf32>
    %cst_43 = arith.constant dense<0.000000e+00> : vector<8x32xf32>
    %72 = tpu.matmul %63, %8, %cst_43 {dimension_numbers = #tpu.dot_dimension_numbers<[1], [0], [0], [1], [0, 0, 1, 1], [], []>} : vector<8x32xf32>, vector<32x32xf32>, vector<8x32xf32> -> vector<8x32xf32>
    %73 = arith.addf %71, %72 : vector<8x32xf32>
    %74 = arith.addf %73, %11 : vector<8x32xf32>
    %75 = math.tanh %74 : vector<8x32xf32>
    %c128 = arith.constant 128 : index
    %c0_44 = arith.constant 0 : index
    %76 = vector.load %arg8[%c128, %c0_44] : memref<256x128xf32, #tpu.memory_space<vmem>>, vector<32x128xf32>
    %cst_45 = arith.constant dense<0.000000e+00> : vector<8x128xf32>
    %77 = tpu.matmul %75, %76, %cst_45 {dimension_numbers = #tpu.dot_dimension_numbers<[1], [0], [0], [1], [0, 0, 1, 1], [], []>} : vector<8x32xf32>, vector<32x128xf32>, vector<8x128xf32> -> vector<8x128xf32>
    %78 = arith.addf %66, %77 : vector<8x128xf32>
    %79 = vector.extract_strided_slice %5 {offsets = [40, 0], sizes = [8, 32], strides = [1, 1]} : vector<64x32xf32> to vector<8x32xf32>
    %cst_46 = arith.constant dense<0.000000e+00> : vector<8x32xf32>
    %80 = tpu.matmul %70, %6, %cst_46 {dimension_numbers = #tpu.dot_dimension_numbers<[1], [0], [0], [1], [0, 0, 1, 1], [], []>} : vector<8x32xf32>, vector<32x32xf32>, vector<8x32xf32> -> vector<8x32xf32>
    %81 = arith.addf %79, %80 : vector<8x32xf32>
    %82 = math.tanh %81 : vector<8x32xf32>
    %cst_47 = arith.constant dense<0.000000e+00> : vector<8x32xf32>
    %83 = tpu.matmul %82, %7, %cst_47 {dimension_numbers = #tpu.dot_dimension_numbers<[1], [0], [0], [1], [0, 0, 1, 1], [], []>} : vector<8x32xf32>, vector<32x32xf32>, vector<8x32xf32> -> vector<8x32xf32>
    %cst_48 = arith.constant dense<0.000000e+00> : vector<8x32xf32>
    %84 = tpu.matmul %75, %8, %cst_48 {dimension_numbers = #tpu.dot_dimension_numbers<[1], [0], [0], [1], [0, 0, 1, 1], [], []>} : vector<8x32xf32>, vector<32x32xf32>, vector<8x32xf32> -> vector<8x32xf32>
    %85 = arith.addf %83, %84 : vector<8x32xf32>
    %86 = arith.addf %85, %11 : vector<8x32xf32>
    %87 = math.tanh %86 : vector<8x32xf32>
    %c160 = arith.constant 160 : index
    %c0_49 = arith.constant 0 : index
    %88 = vector.load %arg8[%c160, %c0_49] : memref<256x128xf32, #tpu.memory_space<vmem>>, vector<32x128xf32>
    %cst_50 = arith.constant dense<0.000000e+00> : vector<8x128xf32>
    %89 = tpu.matmul %87, %88, %cst_50 {dimension_numbers = #tpu.dot_dimension_numbers<[1], [0], [0], [1], [0, 0, 1, 1], [], []>} : vector<8x32xf32>, vector<32x128xf32>, vector<8x128xf32> -> vector<8x128xf32>
    %90 = arith.addf %78, %89 : vector<8x128xf32>
    %91 = vector.extract_strided_slice %5 {offsets = [48, 0], sizes = [8, 32], strides = [1, 1]} : vector<64x32xf32> to vector<8x32xf32>
    %cst_51 = arith.constant dense<0.000000e+00> : vector<8x32xf32>
    %92 = tpu.matmul %82, %6, %cst_51 {dimension_numbers = #tpu.dot_dimension_numbers<[1], [0], [0], [1], [0, 0, 1, 1], [], []>} : vector<8x32xf32>, vector<32x32xf32>, vector<8x32xf32> -> vector<8x32xf32>
    %93 = arith.addf %91, %92 : vector<8x32xf32>
    %94 = math.tanh %93 : vector<8x32xf32>
    %cst_52 = arith.constant dense<0.000000e+00> : vector<8x32xf32>
    %95 = tpu.matmul %94, %7, %cst_52 {dimension_numbers = #tpu.dot_dimension_numbers<[1], [0], [0], [1], [0, 0, 1, 1], [], []>} : vector<8x32xf32>, vector<32x32xf32>, vector<8x32xf32> -> vector<8x32xf32>
    %cst_53 = arith.constant dense<0.000000e+00> : vector<8x32xf32>
    %96 = tpu.matmul %87, %8, %cst_53 {dimension_numbers = #tpu.dot_dimension_numbers<[1], [0], [0], [1], [0, 0, 1, 1], [], []>} : vector<8x32xf32>, vector<32x32xf32>, vector<8x32xf32> -> vector<8x32xf32>
    %97 = arith.addf %95, %96 : vector<8x32xf32>
    %98 = arith.addf %97, %11 : vector<8x32xf32>
    %99 = math.tanh %98 : vector<8x32xf32>
    %c192 = arith.constant 192 : index
    %c0_54 = arith.constant 0 : index
    %100 = vector.load %arg8[%c192, %c0_54] : memref<256x128xf32, #tpu.memory_space<vmem>>, vector<32x128xf32>
    %cst_55 = arith.constant dense<0.000000e+00> : vector<8x128xf32>
    %101 = tpu.matmul %99, %100, %cst_55 {dimension_numbers = #tpu.dot_dimension_numbers<[1], [0], [0], [1], [0, 0, 1, 1], [], []>} : vector<8x32xf32>, vector<32x128xf32>, vector<8x128xf32> -> vector<8x128xf32>
    %102 = arith.addf %90, %101 : vector<8x128xf32>
    %103 = vector.extract_strided_slice %5 {offsets = [56, 0], sizes = [8, 32], strides = [1, 1]} : vector<64x32xf32> to vector<8x32xf32>
    %cst_56 = arith.constant dense<0.000000e+00> : vector<8x32xf32>
    %104 = tpu.matmul %94, %6, %cst_56 {dimension_numbers = #tpu.dot_dimension_numbers<[1], [0], [0], [1], [0, 0, 1, 1], [], []>} : vector<8x32xf32>, vector<32x32xf32>, vector<8x32xf32> -> vector<8x32xf32>
    %105 = arith.addf %103, %104 : vector<8x32xf32>
    %106 = math.tanh %105 : vector<8x32xf32>
    %cst_57 = arith.constant dense<0.000000e+00> : vector<8x32xf32>
    %107 = tpu.matmul %106, %7, %cst_57 {dimension_numbers = #tpu.dot_dimension_numbers<[1], [0], [0], [1], [0, 0, 1, 1], [], []>} : vector<8x32xf32>, vector<32x32xf32>, vector<8x32xf32> -> vector<8x32xf32>
    %cst_58 = arith.constant dense<0.000000e+00> : vector<8x32xf32>
    %108 = tpu.matmul %99, %8, %cst_58 {dimension_numbers = #tpu.dot_dimension_numbers<[1], [0], [0], [1], [0, 0, 1, 1], [], []>} : vector<8x32xf32>, vector<32x32xf32>, vector<8x32xf32> -> vector<8x32xf32>
    %109 = arith.addf %107, %108 : vector<8x32xf32>
    %110 = arith.addf %109, %11 : vector<8x32xf32>
    %111 = math.tanh %110 : vector<8x32xf32>
    %c224 = arith.constant 224 : index
    %c0_59 = arith.constant 0 : index
    %112 = vector.load %arg8[%c224, %c0_59] : memref<256x128xf32, #tpu.memory_space<vmem>>, vector<32x128xf32>
    %cst_60 = arith.constant dense<0.000000e+00> : vector<8x128xf32>
    %113 = tpu.matmul %111, %112, %cst_60 {dimension_numbers = #tpu.dot_dimension_numbers<[1], [0], [0], [1], [0, 0, 1, 1], [], []>} : vector<8x32xf32>, vector<32x128xf32>, vector<8x128xf32> -> vector<8x128xf32>
    %114 = arith.addf %102, %113 : vector<8x128xf32>
    %c0_61 = arith.constant 0 : index
    %c0_62 = arith.constant 0 : index
    %115 = vector.load %arg10[%c0_61, %c0_62] : memref<8x128xf32, #tpu.memory_space<vmem>>, vector<8x128xf32>
    tpu.vector_store %arg10[%c0_61, %c0_62], %114 {strides = array<i32>} : memref<8x128xf32, #tpu.memory_space<vmem>>, vector<8x128xf32>,
    return
  }
}

</mosaic_0001>

<llo_original>
// kernel: tpu_custom_call.1
$region0: #{tpu_custom_call.1}
  #allocation0 [shape = 'u32[]', space=smem, size = 0x4, offset = 0x4, fixed_abs, tag = 'smem constant byte address 0x4 - core index']
  #allocation1 [shape = 'u32[72,128]{1,0:T(1,128)}', space=vmem, size = 0x9000, scoped, tag = 'internal scratch']
  %s0 = inlined_call_operand.vmem [shape: f32[64,28], index: 0, kind: input, shape index: {}]
  %s1 = inlined_call_operand.hbm [shape: f32[2,8,32], index: 1, kind: input, shape index: {}]
  %s2 = inlined_call_operand.vmem [shape: f32[28,32], index: 2, kind: input, shape index: {}]
  %s3 = inlined_call_operand.vmem [shape: f32[32,32], index: 3, kind: input, shape index: {}]
  %s4 = inlined_call_operand.vmem [shape: f32[1,32], index: 4, kind: input, shape index: {}]
  %s5 = inlined_call_operand.vmem [shape: f32[32,32], index: 5, kind: input, shape index: {}]
  %s6 = inlined_call_operand.hbm [shape: f32[32,32], index: 6, kind: input, shape index: {}]
  %s7 = inlined_call_operand.vmem [shape: f32[1,32], index: 7, kind: input, shape index: {}]
  %s8 = inlined_call_operand.hbm [shape: f32[256,128], index: 8, kind: input, shape index: {}]
  %s9 = inlined_call_operand.vmem [shape: f32[1,128], index: 9, kind: input, shape index: {}]
  %s10 = inlined_call_operand.hbm [shape: f32[8,128], index: 10, kind: output, shape index: {}]
  %s11 = sld [smem:[#allocation0]]
  $region62: #{tpu_custom_call.1} parent=0
    _
  %s13 = ssub.s32 1, %s11
  %s14 = scalar_select 0, %s13, %s11
  $region1: #{tpu_custom_call.1} parent=0
    #allocation2 [shape = 'u8[8192]{0}', space=vmem, size = 0x2000, scoped, tag = 'input window, operand 1, single buffered']
    #allocation3 [shape = 's32[1]{0}', space=sflag, size = 0x4, scoped, tag = 'scoped memory for tpu_custom_call.1']
    #allocation4 [shape = 's32[1]{0}', space=sflag, size = 0x4, scoped, tag = 'scoped memory for tpu_custom_call.1']
    #allocation5 [shape = 'u8[16384]{0}', space=vmem, size = 0x4000, scoped, tag = 'input window, operand 6, single buffered']
    #allocation6 [shape = 's32[1]{0}', space=sflag, size = 0x4, scoped, tag = 'scoped memory for tpu_custom_call.1']
    #allocation7 [shape = 'u8[131072]{0}', space=vmem, size = 0x20000, scoped, tag = 'input window, operand 8, single buffered']
    #allocation8 [shape = 'u8[4096]{0}', space=vmem, size = 0x1000, scoped, tag = 'output window, operand 0, single buffered']
    %15 = vsyncpa [#allocation3], 0
    %16 = vsyncpa [#allocation6], 0
    %17 = vsyncpa [#allocation4], 0
    // Predicated region
    $region2: #{tpu_custom_call.1} parent=1 // pred_check
      _
    $region3: #{tpu_custom_call.1} parent=1 // pred_check_branch
      %19 = sbr.rel (0) target = $region5
    $region4: #{tpu_custom_call.1} parent=1 // pred_region
      _
    $region5: #{tpu_custom_call.1} parent=1 // pred_fallthru
      _
    // Predicated region
    $region6: #{tpu_custom_call.1} parent=1 // pred_check
      _
    $region7: #{tpu_custom_call.1} parent=1 // pred_check_branch
      %21 = sbr.rel (0) target = $region9
    $region8: #{tpu_custom_call.1} parent=1 // pred_region
      %23 = vsyncadd [#allocation3], 0
      %s24 = sshll.u32 %s1, 4
      %s25 = int_to_ptr.hbm [resolvable:$true] %s24
      %s26 = sshll.u32 [#allocation2], 4
      %s27 = int_to_ptr.vmem [resolvable:$true] %s26
      %32 = dma.hbm_to_vmem [thread:$0]  %s25, 256, %s27, [#allocation3], 128, 128, 8
    $region9: #{tpu_custom_call.1} parent=1 // pred_fallthru
      _
    // Predicated region
    $region10: #{tpu_custom_call.1} parent=1 // pred_check
      _
    $region11: #{tpu_custom_call.1} parent=1 // pred_check_branch
      %34 = sbr.rel (0) target = $region13
    $region12: #{tpu_custom_call.1} parent=1 // pred_region
      _
    $region13: #{tpu_custom_call.1} parent=1 // pred_fallthru
      _
    // Predicated region
    $region14: #{tpu_custom_call.1} parent=1 // pred_check
      _
    $region15: #{tpu_custom_call.1} parent=1 // pred_check_branch
      %36 = sbr.rel (0) target = $region17
    $region16: #{tpu_custom_call.1} parent=1 // pred_region
      _
    $region17: #{tpu_custom_call.1} parent=1 // pred_fallthru
      _
    // Predicated region
    $region18: #{tpu_custom_call.1} parent=1 // pred_check
      _
    $region19: #{tpu_custom_call.1} parent=1 // pred_check_branch
      %38 = sbr.rel (0) target = $region21
    $region20: #{tpu_custom_call.1} parent=1 // pred_region
      _
    $region21: #{tpu_custom_call.1} parent=1 // pred_fallthru
      _
    // Predicated region
    $region22: #{tpu_custom_call.1} parent=1 // pred_check
      _
    $region23: #{tpu_custom_call.1} parent=1 // pred_check_branch
      %40 = sbr.rel (0) target = $region25
    $region24: #{tpu_custom_call.1} parent=1 // pred_region
      _
    $region25: #{tpu_custom_call.1} parent=1 // pred_fallthru
      _
    // Predicated region
    $region26: #{tpu_custom_call.1} parent=1 // pred_check
      _
    $region27: #{tpu_custom_call.1} parent=1 // pred_check_branch
      %42 = sbr.rel (0) target = $region29
    $region28: #{tpu_custom_call.1} parent=1 // pred_region
      %44 = vsyncadd [#allocation6], 0
      %s45 = sshll.u32 %s6, 4
      %s46 = int_to_ptr.hbm [resolvable:$true] %s45
      %s47 = sshll.u32 [#allocation5], 4
      %s48 = int_to_ptr.vmem [resolvable:$true] %s47
      %53 = dma.hbm_to_vmem [thread:$0]  %s46, 512, %s48, [#allocation6], 128, 128, 8
    $region29: #{tpu_custom_call.1} parent=1 // pred_fallthru
      _
    // Predicated region
    $region30: #{tpu_custom_call.1} parent=1 // pred_check
      _
    $region31: #{tpu_custom_call.1} parent=1 // pred_check_branch
      %55 = sbr.rel (0) target = $region33
    $region32: #{tpu_custom_call.1} parent=1 // pred_region
      _
    $region33: #{tpu_custom_call.1} parent=1 // pred_fallthru
      _
    // Predicated region
    $region34: #{tpu_custom_call.1} parent=1 // pred_check
      _
    $region35: #{tpu_custom_call.1} parent=1 // pred_check_branch
      %57 = sbr.rel (0) target = $region37
    $region36: #{tpu_custom_call.1} parent=1 // pred_region
      %59 = vsyncadd [#allocation6], 0
      %s60 = sshll.u32 %s8, 4
      %s61 = int_to_ptr.hbm [resolvable:$true] %s60
      %s62 = sshll.u32 [#allocation7], 4
      %s63 = int_to_ptr.vmem [resolvable:$true] %s62
      %68 = dma.hbm_to_vmem [thread:$0]  %s61, 4096, %s63, [#allocation6], 128, 128, 8
    $region37: #{tpu_custom_call.1} parent=1 // pred_fallthru
      _
    // Predicated region
    $region38: #{tpu_custom_call.1} parent=1 // pred_check
      _
    $region39: #{tpu_custom_call.1} parent=1 // pred_check_branch
      %70 = sbr.rel (0) target = $region41
    $region40: #{tpu_custom_call.1} parent=1 // pred_region
      _
    $region41: #{tpu_custom_call.1} parent=1 // pred_fallthru
      _
    // Predicated region
    $region42: #{tpu_custom_call.1} parent=1 // pred_check
      _
    $region43: #{tpu_custom_call.1} parent=1 // pred_check_branch
      %72 = sbr.rel (0) target = $region45
    $region44: #{tpu_custom_call.1} parent=1 // pred_region
      %74 = dma.done [#allocation3], 256
    $region45: #{tpu_custom_call.1} parent=1 // pred_fallthru
      _
    // Predicated region
    $region46: #{tpu_custom_call.1} parent=1 // pred_check
      _
    $region47: #{tpu_custom_call.1} parent=1 // pred_check_branch
      %76 = sbr.rel (0) target = $region49
    $region48: #{tpu_custom_call.1} parent=1 // pred_region
      %78 = dma.done [#allocation6], 512
    $region49: #{tpu_custom_call.1} parent=1 // pred_fallthru
      _
    // Predicated region
    $region50: #{tpu_custom_call.1} parent=1 // pred_check
      _
    $region51: #{tpu_custom_call.1} parent=1 // pred_check_branch
      %80 = sbr.rel (0) target = $region53
    $region52: #{tpu_custom_call.1} parent=1 // pred_region
      %82 = dma.done [#allocation6], 4096
    $region53: #{tpu_custom_call.1} parent=1 // pred_fallthru
      _
    %v83 = vld [vmem:[%s0] sm:$0xff]
    %v84 = vld [vmem:[%s0 + $0x8] sm:$0xff]
    %v85 = vld [vmem:[%s0 + $0x10] sm:$0xff]
    %v86 = vld [vmem:[%s0 + $0x18] sm:$0xff]
    %v87 = vld [vmem:[%s0 + $0x20] sm:$0xff]
    %v88 = vld [vmem:[%s0 + $0x28] sm:$0xff]
    %v89 = vld [vmem:[%s0 + $0x30] sm:$0xff]
    %v90 = vld [vmem:[%s0 + $0x38] sm:$0xff]
    %v91 = vld [vmem:[%s2] sm:$0xff]
    %v92 = vld [vmem:[%s2 + $0x8] sm:$0xff]
    %v93 = vld [vmem:[%s2 + $0x10] sm:$0xff]
    %v94 = vld [vmem:[%s2 + $0x18] sm:$0xf]
    %v95 = vld [vmem:[%s4] sm:$0x1]
    %v97 = vperm.slane %v95, 0
    %vm99 = vcmask 228352
    %v101 = vsel %vm99, %v83, 0
    %v104 = vsel %vm99, %v84, 0
    %v107 = vsel %vm99, %v85, 0
    %v110 = vsel %vm99, %v86, 0
    %v113 = vsel %vm99, %v87, 0
    %v116 = vsel %vm99, %v88, 0
    %v119 = vsel %vm99, %v89, 0
    %v122 = vsel %vm99, %v90, 0
    %vm124 = vcmask 1043456
    %v126 = vsel %vm124, %v94, 0
    %128 = vmatpush.msra.mxu0 0.0
    %129 = vmatpush.msra.mxu0 0.0
    %130 = vmatpush.msra.mxu0 0.0
    %131 = vmatpush.msra.mxu0 0.0
    %132 = vmatpush.msra.mxu0 0.0
    %133 = vmatpush.msra.mxu0 0.0
    %134 = vmatpush.msra.mxu0 0.0
    %135 = vmatpush.msra.mxu0 0.0
    %136 = vmatpush.msra.mxu0 0.0
    %137 = vmatpush.msra.mxu0 0.0
    %138 = vmatpush.msra.mxu0 0.0
    %139 = vmatpush.msra.mxu0 0.0
    %140 = vmatpush.msra.mxu0 %v126
    %141 = vmatpush.msra.mxu0 %v93
    %142 = vmatpush.msra.mxu0 %v92
    %143 = vmatpush.msra.mxu0 %v91
    %144 = vmatmul.f32.gmra.mxu0 %v101
    %v145 = vpop.f32.mrf.mxu0
    %v146 = vadd.f32 %v97, %v145
    %147 = vmatmul.f32.gmra.mxu0 %v104
    %v148 = vpop.f32.mrf.mxu0
    %v149 = vadd.f32 %v97, %v148
    %150 = vmatmul.f32.gmra.mxu0 %v107
    %v151 = vpop.f32.mrf.mxu0
    %v152 = vadd.f32 %v97, %v151
    %153 = vmatmul.f32.gmra.mxu0 %v110
    %v154 = vpop.f32.mrf.mxu0
    %v155 = vadd.f32 %v97, %v154
    %156 = vmatmul.f32.gmra.mxu0 %v113
    %v157 = vpop.f32.mrf.mxu0
    %v158 = vadd.f32 %v97, %v157
    %159 = vmatmul.f32.gmra.mxu0 %v116
    %v160 = vpop.f32.mrf.mxu0
    %v161 = vadd.f32 %v97, %v160
    %162 = vmatmul.f32.gmra.mxu0 %v119
    %v163 = vpop.f32.mrf.mxu0
    %v164 = vadd.f32 %v97, %v163
    %165 = vmatmul.f32.gmra.mxu0 %v122
    %v166 = vpop.f32.mrf.mxu0
    %v167 = vadd.f32 %v97, %v166
    %168 = vdwg.mxu0
    %v169 = vld [vmem:[%s3] sm:$0xff]
    %v170 = vld [vmem:[%s3 + $0x8] sm:$0xff]
    %v171 = vld [vmem:[%s3 + $0x10] sm:$0xff]
    %v172 = vld [vmem:[%s3 + $0x18] sm:$0xff]
    %v173 = vld [vmem:[%s5] sm:$0xff]
    %v174 = vld [vmem:[%s5 + $0x8] sm:$0xff]
    %v175 = vld [vmem:[%s5 + $0x10] sm:$0xff]
    %v176 = vld [vmem:[%s5 + $0x18] sm:$0xff]
    %v177 = vld [vmem:[#allocation5] sm:$0xff]
    %v178 = vld [vmem:[#allocation5 + $0x8] sm:$0xff]
    %v179 = vld [vmem:[#allocation5 + $0x10] sm:$0xff]
    %v180 = vld [vmem:[#allocation5 + $0x18] sm:$0xff]
    %v181 = vld [vmem:[%s7] sm:$0x1]
    %v183 = vperm.slane %v181, 0
    %v185 = vld [vmem:[%s9] sm:$0x1]
    %v187 = vperm.slane %v185, 0
    %v189 = vld [vmem:[#allocation2] sm:$0xff]
    %s190 = scalar_lea.vmem [#allocation2], 8
    %v191 = vld [vmem:[%s190] sm:$0xff]
    %vm192 = vcmask 261120
    %v194 = vsel %vm192, %v189, 0
    %196 = vmatpush.msra.mxu0 0.0
    %197 = vmatpush.msra.mxu0 0.0
    %198 = vmatpush.msra.mxu0 0.0
    %199 = vmatpush.msra.mxu0 0.0
    %200 = vmatpush.msra.mxu0 0.0
    %201 = vmatpush.msra.mxu0 0.0
    %202 = vmatpush.msra.mxu0 0.0
    %203 = vmatpush.msra.mxu0 0.0
    %204 = vmatpush.msra.mxu0 0.0
    %205 = vmatpush.msra.mxu0 0.0
    %206 = vmatpush.msra.mxu0 0.0
    %207 = vmatpush.msra.mxu0 0.0
    %208 = vmatpush.msra.mxu0 %v172
    %209 = vmatpush.msra.mxu0 %v171
    %210 = vmatpush.msra.mxu0 %v170
    %211 = vmatpush.msra.mxu0 %v169
    %212 = vmatmul.f32.gmra.mxu0 %v194
    %v213 = vpop.f32.mrf.mxu0
    %v214 = vadd.f32 0.0, %v213
    %215 = vdwg.mxu0
    %v216 = vadd.f32 %v146, %v214
    %v217 = vtanh.pop %v216
    %v219 = vsel %vm192, %v191, 0
    %221 = vmatpush.msra.mxu0 0.0
    %222 = vmatpush.msra.mxu0 0.0
    %223 = vmatpush.msra.mxu0 0.0
    %224 = vmatpush.msra.mxu0 0.0
    %225 = vmatpush.msra.mxu0 0.0
    %226 = vmatpush.msra.mxu0 0.0
    %227 = vmatpush.msra.mxu0 0.0
    %228 = vmatpush.msra.mxu0 0.0
    %229 = vmatpush.msra.mxu0 0.0
    %230 = vmatpush.msra.mxu0 0.0
    %231 = vmatpush.msra.mxu0 0.0
    %232 = vmatpush.msra.mxu0 0.0
    %233 = vmatpush.msra.mxu0 %v180
    %234 = vmatpush.msra.mxu0 %v179
    %235 = vmatpush.msra.mxu0 %v178
    %236 = vmatpush.msra.mxu0 %v177
    %237 = vmatmul.f32.gmra.mxu0 %v219
    %v238 = vpop.f32.mrf.mxu0
    %v239 = vadd.f32 0.0, %v238
    %240 = vdwg.mxu0
    %v242 = vsel %vm192, %v217, 0
    %244 = vmatpush.msra.mxu0 0.0
    %245 = vmatpush.msra.mxu0 0.0
    %246 = vmatpush.msra.mxu0 0.0
    %247 = vmatpush.msra.mxu0 0.0
    %248 = vmatpush.msra.mxu0 0.0
    %249 = vmatpush.msra.mxu0 0.0
    %250 = vmatpush.msra.mxu0 0.0
    %251 = vmatpush.msra.mxu0 0.0
    %252 = vmatpush.msra.mxu0 0.0
    %253 = vmatpush.msra.mxu0 0.0
    %254 = vmatpush.msra.mxu0 0.0
    %255 = vmatpush.msra.mxu0 0.0
    %256 = vmatpush.msra.mxu0 %v176
    %257 = vmatpush.msra.mxu0 %v175
    %258 = vmatpush.msra.mxu0 %v174
    %259 = vmatpush.msra.mxu0 %v173
    %260 = vmatmul.f32.gmra.mxu0 %v242
    %v261 = vpop.f32.mrf.mxu0
    %v262 = vadd.f32 %v239, %v261
    %263 = vdwg.mxu0
    %v264 = vadd.f32 %v262, %v183
    %v265 = vtanh.pop %v264
    %v266 = vld [vmem:[#allocation7] sm:$0xff]
    %v267 = vld [vmem:[#allocation7 + $0x8] sm:$0xff]
    %v268 = vld [vmem:[#allocation7 + $0x10] sm:$0xff]
    %v269 = vld [vmem:[#allocation7 + $0x18] sm:$0xff]
    %v271 = vsel %vm192, %v265, 0
    %273 = vmatpush.msra.mxu0 0.0
    %274 = vmatpush.msra.mxu0 0.0
    %275 = vmatpush.msra.mxu0 0.0
    %276 = vmatpush.msra.mxu0 0.0
    %277 = vmatpush.msra.mxu0 0.0
    %278 = vmatpush.msra.mxu0 0.0
    %279 = vmatpush.msra.mxu0 0.0
    %280 = vmatpush.msra.mxu0 0.0
    %281 = vmatpush.msra.mxu0 0.0
    %282 = vmatpush.msra.mxu0 0.0
    %283 = vmatpush.msra.mxu0 0.0
    %284 = vmatpush.msra.mxu0 0.0
    %285 = vmatpush.msra.mxu0 %v269
    %286 = vmatpush.msra.mxu0 %v268
    %287 = vmatpush.msra.mxu0 %v267
    %288 = vmatpush.msra.mxu0 %v266
    %289 = vmatmul.f32.gmra.mxu0 %v271
    %v290 = vpop.f32.mrf.mxu0
    %v291 = vadd.f32 0.0, %v290
    %292 = vdwg.mxu0
    %v293 = vadd.f32 %v187, %v291
    %294 = vmatpush.msra.mxu0 0.0
    %295 = vmatpush.msra.mxu0 0.0
    %296 = vmatpush.msra.mxu0 0.0
    %297 = vmatpush.msra.mxu0 0.0
    %298 = vmatpush.msra.mxu0 0.0
    %299 = vmatpush.msra.mxu0 0.0
    %300 = vmatpush.msra.mxu0 0.0
    %301 = vmatpush.msra.mxu0 0.0
    %302 = vmatpush.msra.mxu0 0.0
    %303 = vmatpush.msra.mxu0 0.0
    %304 = vmatpush.msra.mxu0 0.0
    %305 = vmatpush.msra.mxu0 0.0
    %306 = vmatpush.msra.mxu0 %v172
    %307 = vmatpush.msra.mxu0 %v171
    %308 = vmatpush.msra.mxu0 %v170
    %309 = vmatpush.msra.mxu0 %v169
    %310 = vmatmul.f32.gmra.mxu0 %v242
    %v311 = vpop.f32.mrf.mxu0
    %v312 = vadd.f32 0.0, %v311
    %313 = vdwg.mxu0
    %v314 = vadd.f32 %v149, %v312
    %v315 = vtanh.pop %v314
    %316 = vmatpush.msra.mxu0 0.0
    %317 = vmatpush.msra.mxu0 0.0
    %318 = vmatpush.msra.mxu0 0.0
    %319 = vmatpush.msra.mxu0 0.0
    %320 = vmatpush.msra.mxu0 0.0
    %321 = vmatpush.msra.mxu0 0.0
    %322 = vmatpush.msra.mxu0 0.0
    %323 = vmatpush.msra.mxu0 0.0
    %324 = vmatpush.msra.mxu0 0.0
    %325 = vmatpush.msra.mxu0 0.0
    %326 = vmatpush.msra.mxu0 0.0
    %327 = vmatpush.msra.mxu0 0.0
    %328 = vmatpush.msra.mxu0 %v180
    %329 = vmatpush.msra.mxu0 %v179
    %330 = vmatpush.msra.mxu0 %v178
    %331 = vmatpush.msra.mxu0 %v177
    %332 = vmatmul.f32.gmra.mxu0 %v271
    %v333 = vpop.f32.mrf.mxu0
    %v334 = vadd.f32 0.0, %v333
    %335 = vdwg.mxu0
    %v337 = vsel %vm192, %v315, 0
    %339 = vmatpush.msra.mxu0 0.0
    %340 = vmatpush.msra.mxu0 0.0
    %341 = vmatpush.msra.mxu0 0.0
    %342 = vmatpush.msra.mxu0 0.0
    %343 = vmatpush.msra.mxu0 0.0
    %344 = vmatpush.msra.mxu0 0.0
    %345 = vmatpush.msra.mxu0 0.0
    %346 = vmatpush.msra.mxu0 0.0
    %347 = vmatpush.msra.mxu0 0.0
    %348 = vmatpush.msra.mxu0 0.0
    %349 = vmatpush.msra.mxu0 0.0
    %350 = vmatpush.msra.mxu0 0.0
    %351 = vmatpush.msra.mxu0 %v176
    %352 = vmatpush.msra.mxu0 %v175
    %353 = vmatpush.msra.mxu0 %v174
    %354 = vmatpush.msra.mxu0 %v173
    %355 = vmatmul.f32.gmra.mxu0 %v337
    %v356 = vpop.f32.mrf.mxu0
    %v357 = vadd.f32 %v334, %v356
    %358 = vdwg.mxu0
    %v359 = vadd.f32 %v357, %v183
    %v360 = vtanh.pop %v359
    %v361 = vld [vmem:[#allocation7 + $0x20] sm:$0xff]
    %v362 = vld [vmem:[#allocation7 + $0x28] sm:$0xff]
    %v363 = vld [vmem:[#allocation7 + $0x30] sm:$0xff]
    %v364 = vld [vmem:[#allocation7 + $0x38] sm:$0xff]
    %v366 = vsel %vm192, %v360, 0
    %368 = vmatpush.msra.mxu0 0.0
    %369 = vmatpush.msra.mxu0 0.0
    %370 = vmatpush.msra.mxu0 0.0
    %371 = vmatpush.msra.mxu0 0.0
    %372 = vmatpush.msra.mxu0 0.0
    %373 = vmatpush.msra.mxu0 0.0
    %374 = vmatpush.msra.mxu0 0.0
    %375 = vmatpush.msra.mxu0 0.0
    %376 = vmatpush.msra.mxu0 0.0
    %377 = vmatpush.msra.mxu0 0.0
    %378 = vmatpush.msra.mxu0 0.0
    %379 = vmatpush.msra.mxu0 0.0
    %380 = vmatpush.msra.mxu0 %v364
    %381 = vmatpush.msra.mxu0 %v363
    %382 = vmatpush.msra.mxu0 %v362
    %383 = vmatpush.msra.mxu0 %v361
    %384 = vmatmul.f32.gmra.mxu0 %v366
    %v385 = vpop.f32.mrf.mxu0
    %v386 = vadd.f32 0.0, %v385
    %387 = vdwg.mxu0
    %v388 = vadd.f32 %v293, %v386
    %389 = vmatpush.msra.mxu0 0.0
    %390 = vmatpush.msra.mxu0 0.0
    %391 = vmatpush.msra.mxu0 0.0
    %392 = vmatpush.msra.mxu0 0.0
    %393 = vmatpush.msra.mxu0 0.0
    %394 = vmatpush.msra.mxu0 0.0
    %395 = vmatpush.msra.mxu0 0.0
    %396 = vmatpush.msra.mxu0 0.0
    %397 = vmatpush.msra.mxu0 0.0
    %398 = vmatpush.msra.mxu0 0.0
    %399 = vmatpush.msra.mxu0 0.0
    %400 = vmatpush.msra.mxu0 0.0
    %401 = vmatpush.msra.mxu0 %v172
    %402 = vmatpush.msra.mxu0 %v171
    %403 = vmatpush.msra.mxu0 %v170
    %404 = vmatpush.msra.mxu0 %v169
    %405 = vmatmul.f32.gmra.mxu0 %v337
    %v406 = vpop.f32.mrf.mxu0
    %v407 = vadd.f32 0.0, %v406
    %408 = vdwg.mxu0
    %v409 = vadd.f32 %v152, %v407
    %v410 = vtanh.pop %v409
    %411 = vmatpush.msra.mxu0 0.0
    %412 = vmatpush.msra.mxu0 0.0
    %413 = vmatpush.msra.mxu0 0.0
    %414 = vmatpush.msra.mxu0 0.0
    %415 = vmatpush.msra.mxu0 0.0
    %416 = vmatpush.msra.mxu0 0.0
    %417 = vmatpush.msra.mxu0 0.0
    %418 = vmatpush.msra.mxu0 0.0
    %419 = vmatpush.msra.mxu0 0.0
    %420 = vmatpush.msra.mxu0 0.0
    %421 = vmatpush.msra.mxu0 0.0
    %422 = vmatpush.msra.mxu0 0.0
    %423 = vmatpush.msra.mxu0 %v180
    %424 = vmatpush.msra.mxu0 %v179
    %425 = vmatpush.msra.mxu0 %v178
    %426 = vmatpush.msra.mxu0 %v177
    %427 = vmatmul.f32.gmra.mxu0 %v366
    %v428 = vpop.f32.mrf.mxu0
    %v429 = vadd.f32 0.0, %v428
    %430 = vdwg.mxu0
    %v432 = vsel %vm192, %v410, 0
    %434 = vmatpush.msra.mxu0 0.0
    %435 = vmatpush.msra.mxu0 0.0
    %436 = vmatpush.msra.mxu0 0.0
    %437 = vmatpush.msra.mxu0 0.0
    %438 = vmatpush.msra.mxu0 0.0
    %439 = vmatpush.msra.mxu0 0.0
    %440 = vmatpush.msra.mxu0 0.0
    %441 = vmatpush.msra.mxu0 0.0
    %442 = vmatpush.msra.mxu0 0.0
    %443 = vmatpush.msra.mxu0 0.0
    %444 = vmatpush.msra.mxu0 0.0
    %445 = vmatpush.msra.mxu0 0.0
    %446 = vmatpush.msra.mxu0 %v176
    %447 = vmatpush.msra.mxu0 %v175
    %448 = vmatpush.msra.mxu0 %v174
    %449 = vmatpush.msra.mxu0 %v173
    %450 = vmatmul.f32.gmra.mxu0 %v432
    %v451 = vpop.f32.mrf.mxu0
    %v452 = vadd.f32 %v429, %v451
    %453 = vdwg.mxu0
    %v454 = vadd.f32 %v452, %v183
    %v455 = vtanh.pop %v454
    %v456 = vld [vmem:[#allocation7 + $0x40] sm:$0xff]
    %v457 = vld [vmem:[#allocation7 + $0x48] sm:$0xff]
    %v458 = vld [vmem:[#allocation7 + $0x50] sm:$0xff]
    %v459 = vld [vmem:[#allocation7 + $0x58] sm:$0xff]
    %v461 = vsel %vm192, %v455, 0
    %463 = vmatpush.msra.mxu0 0.0
    %464 = vmatpush.msra.mxu0 0.0
    %465 = vmatpush.msra.mxu0 0.0
    %466 = vmatpush.msra.mxu0 0.0
    %467 = vmatpush.msra.mxu0 0.0
    %468 = vmatpush.msra.mxu0 0.0
    %469 = vmatpush.msra.mxu0 0.0
    %470 = vmatpush.msra.mxu0 0.0
    %471 = vmatpush.msra.mxu0 0.0
    %472 = vmatpush.msra.mxu0 0.0
    %473 = vmatpush.msra.mxu0 0.0
    %474 = vmatpush.msra.mxu0 0.0
    %475 = vmatpush.msra.mxu0 %v459
    %476 = vmatpush.msra.mxu0 %v458
    %477 = vmatpush.msra.mxu0 %v457
    %478 = vmatpush.msra.mxu0 %v456
    %479 = vmatmul.f32.gmra.mxu0 %v461
    %v480 = vpop.f32.mrf.mxu0
    %v481 = vadd.f32 0.0, %v480
    %482 = vdwg.mxu0
    %v483 = vadd.f32 %v388, %v481
    %484 = vmatpush.msra.mxu0 0.0
    %485 = vmatpush.msra.mxu0 0.0
    %486 = vmatpush.msra.mxu0 0.0
    %487 = vmatpush.msra.mxu0 0.0
    %488 = vmatpush.msra.mxu0 0.0
    %489 = vmatpush.msra.mxu0 0.0
    %490 = vmatpush.msra.mxu0 0.0
    %491 = vmatpush.msra.mxu0 0.0
    %492 = vmatpush.msra.mxu0 0.0
    %493 = vmatpush.msra.mxu0 0.0
    %494 = vmatpush.msra.mxu0 0.0
    %495 = vmatpush.msra.mxu0 0.0
    %496 = vmatpush.msra.mxu0 %v172
    %497 = vmatpush.msra.mxu0 %v171
    %498 = vmatpush.msra.mxu0 %v170
    %499 = vmatpush.msra.mxu0 %v169
    %500 = vmatmul.f32.gmra.mxu0 %v432
    %v501 = vpop.f32.mrf.mxu0
    %v502 = vadd.f32 0.0, %v501
    %503 = vdwg.mxu0
    %v504 = vadd.f32 %v155, %v502
    %v505 = vtanh.pop %v504
    %506 = vmatpush.msra.mxu0 0.0
    %507 = vmatpush.msra.mxu0 0.0
    %508 = vmatpush.msra.mxu0 0.0
    %509 = vmatpush.msra.mxu0 0.0
    %510 = vmatpush.msra.mxu0 0.0
    %511 = vmatpush.msra.mxu0 0.0
    %512 = vmatpush.msra.mxu0 0.0
    %513 = vmatpush.msra.mxu0 0.0
    %514 = vmatpush.msra.mxu0 0.0
    %515 = vmatpush.msra.mxu0 0.0
    %516 = vmatpush.msra.mxu0 0.0
    %517 = vmatpush.msra.mxu0 0.0
    %518 = vmatpush.msra.mxu0 %v180
    %519 = vmatpush.msra.mxu0 %v179
    %520 = vmatpush.msra.mxu0 %v178
    %521 = vmatpush.msra.mxu0 %v177
    %522 = vmatmul.f32.gmra.mxu0 %v461
    %v523 = vpop.f32.mrf.mxu0
    %v524 = vadd.f32 0.0, %v523
    %525 = vdwg.mxu0
    %v527 = vsel %vm192, %v505, 0
    %529 = vmatpush.msra.mxu0 0.0
    %530 = vmatpush.msra.mxu0 0.0
    %531 = vmatpush.msra.mxu0 0.0
    %532 = vmatpush.msra.mxu0 0.0
    %533 = vmatpush.msra.mxu0 0.0
    %534 = vmatpush.msra.mxu0 0.0
    %535 = vmatpush.msra.mxu0 0.0
    %536 = vmatpush.msra.mxu0 0.0
    %537 = vmatpush.msra.mxu0 0.0
    %538 = vmatpush.msra.mxu0 0.0
    %539 = vmatpush.msra.mxu0 0.0
    %540 = vmatpush.msra.mxu0 0.0
    %541 = vmatpush.msra.mxu0 %v176
    %542 = vmatpush.msra.mxu0 %v175
    %543 = vmatpush.msra.mxu0 %v174
    %544 = vmatpush.msra.mxu0 %v173
    %545 = vmatmul.f32.gmra.mxu0 %v527
    %v546 = vpop.f32.mrf.mxu0
    %v547 = vadd.f32 %v524, %v546
    %548 = vdwg.mxu0
    %v549 = vadd.f32 %v547, %v183
    %v550 = vtanh.pop %v549
    %v551 = vld [vmem:[#allocation7 + $0x60] sm:$0xff]
    %v552 = vld [vmem:[#allocation7 + $0x68] sm:$0xff]
    %v553 = vld [vmem:[#allocation7 + $0x70] sm:$0xff]
    %v554 = vld [vmem:[#allocation7 + $0x78] sm:$0xff]
    %v556 = vsel %vm192, %v550, 0
    %558 = vmatpush.msra.mxu0 0.0
    %559 = vmatpush.msra.mxu0 0.0
    %560 = vmatpush.msra.mxu0 0.0
    %561 = vmatpush.msra.mxu0 0.0
    %562 = vmatpush.msra.mxu0 0.0
    %563 = vmatpush.msra.mxu0 0.0
    %564 = vmatpush.msra.mxu0 0.0
    %565 = vmatpush.msra.mxu0 0.0
    %566 = vmatpush.msra.mxu0 0.0
    %567 = vmatpush.msra.mxu0 0.0
    %568 = vmatpush.msra.mxu0 0.0
    %569 = vmatpush.msra.mxu0 0.0
    %570 = vmatpush.msra.mxu0 %v554
    %571 = vmatpush.msra.mxu0 %v553
    %572 = vmatpush.msra.mxu0 %v552
    %573 = vmatpush.msra.mxu0 %v551
    %574 = vmatmul.f32.gmra.mxu0 %v556
    %v575 = vpop.f32.mrf.mxu0
    %v576 = vadd.f32 0.0, %v575
    %577 = vdwg.mxu0
    %v578 = vadd.f32 %v483, %v576
    %579 = vmatpush.msra.mxu0 0.0
    %580 = vmatpush.msra.mxu0 0.0
    %581 = vmatpush.msra.mxu0 0.0
    %582 = vmatpush.msra.mxu0 0.0
    %583 = vmatpush.msra.mxu0 0.0
    %584 = vmatpush.msra.mxu0 0.0
    %585 = vmatpush.msra.mxu0 0.0
    %586 = vmatpush.msra.mxu0 0.0
    %587 = vmatpush.msra.mxu0 0.0
    %588 = vmatpush.msra.mxu0 0.0
    %589 = vmatpush.msra.mxu0 0.0
    %590 = vmatpush.msra.mxu0 0.0
    %591 = vmatpush.msra.mxu0 %v172
    %592 = vmatpush.msra.mxu0 %v171
    %593 = vmatpush.msra.mxu0 %v170
    %594 = vmatpush.msra.mxu0 %v169
    %595 = vmatmul.f32.gmra.mxu0 %v527
    %v596 = vpop.f32.mrf.mxu0
    %v597 = vadd.f32 0.0, %v596
    %598 = vdwg.mxu0
    %v599 = vadd.f32 %v158, %v597
    %v600 = vtanh.pop %v599
    %601 = vmatpush.msra.mxu0 0.0
    %602 = vmatpush.msra.mxu0 0.0
    %603 = vmatpush.msra.mxu0 0.0
    %604 = vmatpush.msra.mxu0 0.0
    %605 = vmatpush.msra.mxu0 0.0
    %606 = vmatpush.msra.mxu0 0.0
    %607 = vmatpush.msra.mxu0 0.0
    %608 = vmatpush.msra.mxu0 0.0
    %609 = vmatpush.msra.mxu0 0.0
    %610 = vmatpush.msra.mxu0 0.0
    %611 = vmatpush.msra.mxu0 0.0
    %612 = vmatpush.msra.mxu0 0.0
    %613 = vmatpush.msra.mxu0 %v180
    %614 = vmatpush.msra.mxu0 %v179
    %615 = vmatpush.msra.mxu0 %v178
    %616 = vmatpush.msra.mxu0 %v177
    %617 = vmatmul.f32.gmra.mxu0 %v556
    %v618 = vpop.f32.mrf.mxu0
    %v619 = vadd.f32 0.0, %v618
    %620 = vdwg.mxu0
    %v622 = vsel %vm192, %v600, 0
    %624 = vmatpush.msra.mxu0 0.0
    %625 = vmatpush.msra.mxu0 0.0
    %626 = vmatpush.msra.mxu0 0.0
    %627 = vmatpush.msra.mxu0 0.0
    %628 = vmatpush.msra.mxu0 0.0
    %629 = vmatpush.msra.mxu0 0.0
    %630 = vmatpush.msra.mxu0 0.0
    %631 = vmatpush.msra.mxu0 0.0
    %632 = vmatpush.msra.mxu0 0.0
    %633 = vmatpush.msra.mxu0 0.0
    %634 = vmatpush.msra.mxu0 0.0
    %635 = vmatpush.msra.mxu0 0.0
    %636 = vmatpush.msra.mxu0 %v176
    %637 = vmatpush.msra.mxu0 %v175
    %638 = vmatpush.msra.mxu0 %v174
    %639 = vmatpush.msra.mxu0 %v173
    %640 = vmatmul.f32.gmra.mxu0 %v622
    %v641 = vpop.f32.mrf.mxu0
    %v642 = vadd.f32 %v619, %v641
    %643 = vdwg.mxu0
    %v644 = vadd.f32 %v642, %v183
    %v645 = vtanh.pop %v644
    %v646 = vld [vmem:[#allocation7 + $0x80] sm:$0xff]
    %v647 = vld [vmem:[#allocation7 + $0x88] sm:$0xff]
    %v648 = vld [vmem:[#allocation7 + $0x90] sm:$0xff]
    %v649 = vld [vmem:[#allocation7 + $0x98] sm:$0xff]
    %v651 = vsel %vm192, %v645, 0
    %653 = vmatpush.msra.mxu0 0.0
    %654 = vmatpush.msra.mxu0 0.0
    %655 = vmatpush.msra.mxu0 0.0
    %656 = vmatpush.msra.mxu0 0.0
    %657 = vmatpush.msra.mxu0 0.0
    %658 = vmatpush.msra.mxu0 0.0
    %659 = vmatpush.msra.mxu0 0.0
    %660 = vmatpush.msra.mxu0 0.0
    %661 = vmatpush.msra.mxu0 0.0
    %662 = vmatpush.msra.mxu0 0.0
    %663 = vmatpush.msra.mxu0 0.0
    %664 = vmatpush.msra.mxu0 0.0
    %665 = vmatpush.msra.mxu0 %v649
    %666 = vmatpush.msra.mxu0 %v648
    %667 = vmatpush.msra.mxu0 %v647
    %668 = vmatpush.msra.mxu0 %v646
    %669 = vmatmul.f32.gmra.mxu0 %v651
    %v670 = vpop.f32.mrf.mxu0
    %v671 = vadd.f32 0.0, %v670
    %672 = vdwg.mxu0
    %v673 = vadd.f32 %v578, %v671
    %674 = vmatpush.msra.mxu0 0.0
    %675 = vmatpush.msra.mxu0 0.0
    %676 = vmatpush.msra.mxu0 0.0
    %677 = vmatpush.msra.mxu0 0.0
    %678 = vmatpush.msra.mxu0 0.0
    %679 = vmatpush.msra.mxu0 0.0
    %680 = vmatpush.msra.mxu0 0.0
    %681 = vmatpush.msra.mxu0 0.0
    %682 = vmatpush.msra.mxu0 0.0
    %683 = vmatpush.msra.mxu0 0.0
    %684 = vmatpush.msra.mxu0 0.0
    %685 = vmatpush.msra.mxu0 0.0
    %686 = vmatpush.msra.mxu0 %v172
    %687 = vmatpush.msra.mxu0 %v171
    %688 = vmatpush.msra.mxu0 %v170
    %689 = vmatpush.msra.mxu0 %v169
    %690 = vmatmul.f32.gmra.mxu0 %v622
    %v691 = vpop.f32.mrf.mxu0
    %v692 = vadd.f32 0.0, %v691
    %693 = vdwg.mxu0
    %v694 = vadd.f32 %v161, %v692
    %v695 = vtanh.pop %v694
    %696 = vmatpush.msra.mxu0 0.0
    %697 = vmatpush.msra.mxu0 0.0
    %698 = vmatpush.msra.mxu0 0.0
    %699 = vmatpush.msra.mxu0 0.0
    %700 = vmatpush.msra.mxu0 0.0
    %701 = vmatpush.msra.mxu0 0.0
    %702 = vmatpush.msra.mxu0 0.0
    %703 = vmatpush.msra.mxu0 0.0
    %704 = vmatpush.msra.mxu0 0.0
    %705 = vmatpush.msra.mxu0 0.0
    %706 = vmatpush.msra.mxu0 0.0
    %707 = vmatpush.msra.mxu0 0.0
    %708 = vmatpush.msra.mxu0 %v180
    %709 = vmatpush.msra.mxu0 %v179
    %710 = vmatpush.msra.mxu0 %v178
    %711 = vmatpush.msra.mxu0 %v177
    %712 = vmatmul.f32.gmra.mxu0 %v651
    %v713 = vpop.f32.mrf.mxu0
    %v714 = vadd.f32 0.0, %v713
    %715 = vdwg.mxu0
    %v717 = vsel %vm192, %v695, 0
    %719 = vmatpush.msra.mxu0 0.0
    %720 = vmatpush.msra.mxu0 0.0
    %721 = vmatpush.msra.mxu0 0.0
    %722 = vmatpush.msra.mxu0 0.0
    %723 = vmatpush.msra.mxu0 0.0
    %724 = vmatpush.msra.mxu0 0.0
    %725 = vmatpush.msra.mxu0 0.0
    %726 = vmatpush.msra.mxu0 0.0
    %727 = vmatpush.msra.mxu0 0.0
    %728 = vmatpush.msra.mxu0 0.0
    %729 = vmatpush.msra.mxu0 0.0
    %730 = vmatpush.msra.mxu0 0.0
    %731 = vmatpush.msra.mxu0 %v176
    %732 = vmatpush.msra.mxu0 %v175
    %733 = vmatpush.msra.mxu0 %v174
    %734 = vmatpush.msra.mxu0 %v173
    %735 = vmatmul.f32.gmra.mxu0 %v717
    %v736 = vpop.f32.mrf.mxu0
    %v737 = vadd.f32 %v714, %v736
    %738 = vdwg.mxu0
    %v739 = vadd.f32 %v737, %v183
    %v740 = vtanh.pop %v739
    %v741 = vld [vmem:[#allocation7 + $0xa0] sm:$0xff]
    %v742 = vld [vmem:[#allocation7 + $0xa8] sm:$0xff]
    %v743 = vld [vmem:[#allocation7 + $0xb0] sm:$0xff]
    %v744 = vld [vmem:[#allocation7 + $0xb8] sm:$0xff]
    %v746 = vsel %vm192, %v740, 0
    %748 = vmatpush.msra.mxu0 0.0
    %749 = vmatpush.msra.mxu0 0.0
    %750 = vmatpush.msra.mxu0 0.0
    %751 = vmatpush.msra.mxu0 0.0
    %752 = vmatpush.msra.mxu0 0.0
    %753 = vmatpush.msra.mxu0 0.0
    %754 = vmatpush.msra.mxu0 0.0
    %755 = vmatpush.msra.mxu0 0.0
    %756 = vmatpush.msra.mxu0 0.0
    %757 = vmatpush.msra.mxu0 0.0
    %758 = vmatpush.msra.mxu0 0.0
    %759 = vmatpush.msra.mxu0 0.0
    %760 = vmatpush.msra.mxu0 %v744
    %761 = vmatpush.msra.mxu0 %v743
    %762 = vmatpush.msra.mxu0 %v742
    %763 = vmatpush.msra.mxu0 %v741
    %764 = vmatmul.f32.gmra.mxu0 %v746
    %v765 = vpop.f32.mrf.mxu0
    %v766 = vadd.f32 0.0, %v765
    %767 = vdwg.mxu0
    %v768 = vadd.f32 %v673, %v766
    %769 = vmatpush.msra.mxu0 0.0
    %770 = vmatpush.msra.mxu0 0.0
    %771 = vmatpush.msra.mxu0 0.0
    %772 = vmatpush.msra.mxu0 0.0
    %773 = vmatpush.msra.mxu0 0.0
    %774 = vmatpush.msra.mxu0 0.0
    %775 = vmatpush.msra.mxu0 0.0
    %776 = vmatpush.msra.mxu0 0.0
    %777 = vmatpush.msra.mxu0 0.0
    %778 = vmatpush.msra.mxu0 0.0
    %779 = vmatpush.msra.mxu0 0.0
    %780 = vmatpush.msra.mxu0 0.0
    %781 = vmatpush.msra.mxu0 %v172
    %782 = vmatpush.msra.mxu0 %v171
    %783 = vmatpush.msra.mxu0 %v170
    %784 = vmatpush.msra.mxu0 %v169
    %785 = vmatmul.f32.gmra.mxu0 %v717
    %v786 = vpop.f32.mrf.mxu0
    %v787 = vadd.f32 0.0, %v786
    %788 = vdwg.mxu0
    %v789 = vadd.f32 %v164, %v787
    %v790 = vtanh.pop %v789
    %791 = vmatpush.msra.mxu0 0.0
    %792 = vmatpush.msra.mxu0 0.0
    %793 = vmatpush.msra.mxu0 0.0
    %794 = vmatpush.msra.mxu0 0.0
    %795 = vmatpush.msra.mxu0 0.0
    %796 = vmatpush.msra.mxu0 0.0
    %797 = vmatpush.msra.mxu0 0.0
    %798 = vmatpush.msra.mxu0 0.0
    %799 = vmatpush.msra.mxu0 0.0
    %800 = vmatpush.msra.mxu0 0.0
    %801 = vmatpush.msra.mxu0 0.0
    %802 = vmatpush.msra.mxu0 0.0
    %803 = vmatpush.msra.mxu0 %v180
    %804 = vmatpush.msra.mxu0 %v179
    %805 = vmatpush.msra.mxu0 %v178
    %806 = vmatpush.msra.mxu0 %v177
    %807 = vmatmul.f32.gmra.mxu0 %v746
    %v808 = vpop.f32.mrf.mxu0
    %v809 = vadd.f32 0.0, %v808
    %810 = vdwg.mxu0
    %v812 = vsel %vm192, %v790, 0
    %814 = vmatpush.msra.mxu0 0.0
    %815 = vmatpush.msra.mxu0 0.0
    %816 = vmatpush.msra.mxu0 0.0
    %817 = vmatpush.msra.mxu0 0.0
    %818 = vmatpush.msra.mxu0 0.0
    %819 = vmatpush.msra.mxu0 0.0
    %820 = vmatpush.msra.mxu0 0.0
    %821 = vmatpush.msra.mxu0 0.0
    %822 = vmatpush.msra.mxu0 0.0
    %823 = vmatpush.msra.mxu0 0.0
    %824 = vmatpush.msra.mxu0 0.0
    %825 = vmatpush.msra.mxu0 0.0
    %826 = vmatpush.msra.mxu0 %v176
    %827 = vmatpush.msra.mxu0 %v175
    %828 = vmatpush.msra.mxu0 %v174
    %829 = vmatpush.msra.mxu0 %v173
    %830 = vmatmul.f32.gmra.mxu0 %v812
    %v831 = vpop.f32.mrf.mxu0
    %v832 = vadd.f32 %v809, %v831
    %833 = vdwg.mxu0
    %v834 = vadd.f32 %v832, %v183
    %v835 = vtanh.pop %v834
    %v836 = vld [vmem:[#allocation7 + $0xc0] sm:$0xff]
    %v837 = vld [vmem:[#allocation7 + $0xc8] sm:$0xff]
    %v838 = vld [vmem:[#allocation7 + $0xd0] sm:$0xff]
    %v839 = vld [vmem:[#allocation7 + $0xd8] sm:$0xff]
    %v841 = vsel %vm192, %v835, 0
    %843 = vmatpush.msra.mxu0 0.0
    %844 = vmatpush.msra.mxu0 0.0
    %845 = vmatpush.msra.mxu0 0.0
    %846 = vmatpush.msra.mxu0 0.0
    %847 = vmatpush.msra.mxu0 0.0
    %848 = vmatpush.msra.mxu0 0.0
    %849 = vmatpush.msra.mxu0 0.0
    %850 = vmatpush.msra.mxu0 0.0
    %851 = vmatpush.msra.mxu0 0.0
    %852 = vmatpush.msra.mxu0 0.0
    %853 = vmatpush.msra.mxu0 0.0
    %854 = vmatpush.msra.mxu0 0.0
    %855 = vmatpush.msra.mxu0 %v839
    %856 = vmatpush.msra.mxu0 %v838
    %857 = vmatpush.msra.mxu0 %v837
    %858 = vmatpush.msra.mxu0 %v836
    %859 = vmatmul.f32.gmra.mxu0 %v841
    %v860 = vpop.f32.mrf.mxu0
    %v861 = vadd.f32 0.0, %v860
    %862 = vdwg.mxu0
    %v863 = vadd.f32 %v768, %v861
    %864 = vmatpush.msra.mxu0 0.0
    %865 = vmatpush.msra.mxu0 0.0
    %866 = vmatpush.msra.mxu0 0.0
    %867 = vmatpush.msra.mxu0 0.0
    %868 = vmatpush.msra.mxu0 0.0
    %869 = vmatpush.msra.mxu0 0.0
    %870 = vmatpush.msra.mxu0 0.0
    %871 = vmatpush.msra.mxu0 0.0
    %872 = vmatpush.msra.mxu0 0.0
    %873 = vmatpush.msra.mxu0 0.0
    %874 = vmatpush.msra.mxu0 0.0
    %875 = vmatpush.msra.mxu0 0.0
    %876 = vmatpush.msra.mxu0 %v172
    %877 = vmatpush.msra.mxu0 %v171
    %878 = vmatpush.msra.mxu0 %v170
    %879 = vmatpush.msra.mxu0 %v169
    %880 = vmatmul.f32.gmra.mxu0 %v812
    %v881 = vpop.f32.mrf.mxu0
    %v882 = vadd.f32 0.0, %v881
    %883 = vdwg.mxu0
    %v884 = vadd.f32 %v167, %v882
    %v885 = vtanh.pop %v884
    %886 = vmatpush.msra.mxu0 0.0
    %887 = vmatpush.msra.mxu0 0.0
    %888 = vmatpush.msra.mxu0 0.0
    %889 = vmatpush.msra.mxu0 0.0
    %890 = vmatpush.msra.mxu0 0.0
    %891 = vmatpush.msra.mxu0 0.0
    %892 = vmatpush.msra.mxu0 0.0
    %893 = vmatpush.msra.mxu0 0.0
    %894 = vmatpush.msra.mxu0 0.0
    %895 = vmatpush.msra.mxu0 0.0
    %896 = vmatpush.msra.mxu0 0.0
    %897 = vmatpush.msra.mxu0 0.0
    %898 = vmatpush.msra.mxu0 %v180
    %899 = vmatpush.msra.mxu0 %v179
    %900 = vmatpush.msra.mxu0 %v178
    %901 = vmatpush.msra.mxu0 %v177
    %902 = vmatmul.f32.gmra.mxu0 %v841
    %v903 = vpop.f32.mrf.mxu0
    %v904 = vadd.f32 0.0, %v903
    %905 = vdwg.mxu0
    %v907 = vsel %vm192, %v885, 0
    %909 = vmatpush.msra.mxu0 0.0
    %910 = vmatpush.msra.mxu0 0.0
    %911 = vmatpush.msra.mxu0 0.0
    %912 = vmatpush.msra.mxu0 0.0
    %913 = vmatpush.msra.mxu0 0.0
    %914 = vmatpush.msra.mxu0 0.0
    %915 = vmatpush.msra.mxu0 0.0
    %916 = vmatpush.msra.mxu0 0.0
    %917 = vmatpush.msra.mxu0 0.0
    %918 = vmatpush.msra.mxu0 0.0
    %919 = vmatpush.msra.mxu0 0.0
    %920 = vmatpush.msra.mxu0 0.0
    %921 = vmatpush.msra.mxu0 %v176
    %922 = vmatpush.msra.mxu0 %v175
    %923 = vmatpush.msra.mxu0 %v174
    %924 = vmatpush.msra.mxu0 %v173
    %925 = vmatmul.f32.gmra.mxu0 %v907
    %v926 = vpop.f32.mrf.mxu0
    %v927 = vadd.f32 %v904, %v926
    %928 = vdwg.mxu0
    %v929 = vadd.f32 %v927, %v183
    %v930 = vtanh.pop %v929
    %v931 = vld [vmem:[#allocation7 + $0xe0] sm:$0xff]
    %v932 = vld [vmem:[#allocation7 + $0xe8] sm:$0xff]
    %v933 = vld [vmem:[#allocation7 + $0xf0] sm:$0xff]
    %v934 = vld [vmem:[#allocation7 + $0xf8] sm:$0xff]
    %v936 = vsel %vm192, %v930, 0
    %938 = vmatpush.msra.mxu0 0.0
    %939 = vmatpush.msra.mxu0 0.0
    %940 = vmatpush.msra.mxu0 0.0
    %941 = vmatpush.msra.mxu0 0.0
    %942 = vmatpush.msra.mxu0 0.0
    %943 = vmatpush.msra.mxu0 0.0
    %944 = vmatpush.msra.mxu0 0.0
    %945 = vmatpush.msra.mxu0 0.0
    %946 = vmatpush.msra.mxu0 0.0
    %947 = vmatpush.msra.mxu0 0.0
    %948 = vmatpush.msra.mxu0 0.0
    %949 = vmatpush.msra.mxu0 0.0
    %950 = vmatpush.msra.mxu0 %v934
    %951 = vmatpush.msra.mxu0 %v933
    %952 = vmatpush.msra.mxu0 %v932
    %953 = vmatpush.msra.mxu0 %v931
    %954 = vmatmul.f32.gmra.mxu0 %v936
    %v955 = vpop.f32.mrf.mxu0
    %v956 = vadd.f32 0.0, %v955
    %957 = vdwg.mxu0
    %v958 = vadd.f32 %v863, %v956
    %959 = vst [vmem:[#allocation8] sm:$0xff] %v958
    // Predicated region
    $region54: #{tpu_custom_call.1} parent=1 // pred_check
      _
    $region55: #{tpu_custom_call.1} parent=1 // pred_check_branch
      %961 = sbr.rel (0) target = $region57
    $region56: #{tpu_custom_call.1} parent=1 // pred_region
      %963 = vsyncadd [#allocation4], 0
      %s965 = sshll.u32 [#allocation8], 4
      %s966 = int_to_ptr.vmem [resolvable:$true] %s965
      %s967 = sshll.u32 %s10, 4
      %s968 = int_to_ptr.hbm [resolvable:$true] %s967
      %970 = dma.vmem_to_hbm [thread:$0]  %s966, 128, %s968, [#allocation4]
    $region57: #{tpu_custom_call.1} parent=1 // pred_fallthru
      _
    // Predicated region
    $region58: #{tpu_custom_call.1} parent=1 // pred_check
      _
    $region59: #{tpu_custom_call.1} parent=1 // pred_check_branch
      %972 = sbr.rel (0) target = $region61
    $region60: #{tpu_custom_call.1} parent=1 // pred_region
      %974 = dma.done [#allocation4], 128
    $region61: #{tpu_custom_call.1} parent=1 // pred_fallthru
      _
    %975 = vsyncpa [#allocation3], 1
    %976 = vsyncpa [#allocation6], 1
    %977 = vsyncpa [#allocation4], 1

</llo_original>
